<compile_context>
chip_gen: v5e
topology: v5e:2x2
jax: 0.10.0
libtpu: 0.0.40
codegen_flags: <defaults>
</compile_context>

<pallas_src>
import jax
import jax.numpy as jnp
from jax.experimental import pallas as pl
from jax.experimental.pallas import tpu as pltpu


def _bce_kernel(x_ref, y_ref, o_ref):
    j = pl.program_id(1)

    @pl.when(j == 0)
    def _():
        o_ref[...] = jnp.zeros_like(o_ref)

    x = x_ref[...]
    y = y_ref[...]
    # numerically stable BCE-with-logits, per element (all VPU/EUP work)
    per = jnp.maximum(x, 0.0) - x * y + jnp.log1p(jnp.exp(-jnp.abs(x)))
    # Fold sublane groups: (block_rows, lanes) -> (block_rows//8, 8, lanes), sum over the
    # leading (major) axis = pure vector adds; cross-lane reduce is deferred to the wrapper.
    o_ref[...] += per.reshape(-1, 8, per.shape[-1]).sum(axis=0)


def binary_ce_loss(predict, target, *, lanes=1024, max_block_rows=512, num_parallel=2):
    """Mean BCE-with-logits over all elements. predict/target: same shape."""
    total = predict.size
    x = predict.reshape(-1).astype(jnp.float32)
    y = target.reshape(-1).astype(jnp.float32)

    # Rows needed at the chosen lane width; block rows = multiple of 8, capped.
    rows = -(-total // lanes)
    block_rows = max(8, min(max_block_rows, ((rows + 7) // 8) * 8))

    # Pad so the row count divides num_parallel * block_rows.
    super_rows = num_parallel * block_rows
    rows_padded = ((rows + super_rows - 1) // super_rows) * super_rows
    steps = rows_padded // super_rows

    pad = rows_padded * lanes - total
    if pad:
        # x = -1e30, y = 0 contributes exactly 0: max(x,0)=0, x*y=0, log1p(exp(-1e30))=0.
        x = jnp.concatenate([x, jnp.full((pad,), -1e30, jnp.float32)])
        y = jnp.concatenate([y, jnp.zeros((pad,), jnp.float32)])
    x2 = x.reshape(rows_padded, lanes)
    y2 = y.reshape(rows_padded, lanes)

    in_map = lambda p, j: (p * steps + j, 0)
    out = pl.pallas_call(
        _bce_kernel,
        out_shape=jax.ShapeDtypeStruct((num_parallel * 8, lanes), jnp.float32),
        grid=(num_parallel, steps),
        in_specs=[
            pl.BlockSpec((block_rows, lanes), in_map),
            pl.BlockSpec((block_rows, lanes), in_map),
        ],
        out_specs=pl.BlockSpec((8, lanes), lambda p, j: (p, 0)),
        compiler_params=pltpu.CompilerParams(
            dimension_semantics=("parallel", "arbitrary"),
            vmem_limit_bytes=32 * 1024 * 1024,
        ),
    )(x2, y2)

    # Tiny final cross-lane reduce + mean scale done in XLA.
    return jnp.sum(out) / jnp.float32(total)


def _reference(predict, target):
    # pure-JAX reference (matches torch BCEWithLogitsLoss, reduction='mean')
    B = predict.shape[0]
    x = predict.reshape(B, -1).astype(jnp.float32)
    y = target.reshape(B, -1).astype(jnp.float32)
    loss = jnp.maximum(x, 0.0) - x * y + jnp.log1p(jnp.exp(-jnp.abs(x)))
    return jnp.mean(loss)


if __name__ == "__main__":
    key = jax.random.PRNGKey(0)
    k1, k2 = jax.random.split(key)
    B, C, H, W = 2, 4, 16, 16
    predict = jax.random.normal(k1, (B, C, H, W), dtype=jnp.float32)
    target = (jax.random.uniform(k2, (B, C, H, W)) > 0.5).astype(jnp.float32)

    loss = binary_ce_loss(predict, target)
    loss = jax.block_until_ready(loss)

    ref = _reference(predict, target)
    assert jnp.allclose(loss, ref, rtol=1e-5, atol=1e-5), (loss, ref)
    print("KERNEL_OK")
</pallas_src>

<mosaic_0001>
module attributes {stable_mosaic.version = 11 : i64} {
  func.func @_bce_kernel(%arg0: i32, %arg1: i32, %arg2: memref<8x1024xf32, #tpu.memory_space<vmem>>, %arg3: memref<8x1024xf32, #tpu.memory_space<vmem>>, %arg4: memref<8x1024xf32, #tpu.memory_space<vmem>>) attributes {dimension_semantics = [#tpu.dimension_semantics<parallel>, #tpu.dimension_semantics<arbitrary>], iteration_bounds = array<i64: 2, 1>, scalar_prefetch = 0 : i64, scratch_operands = 0 : i64, tpu.core_type = #tpu.core_type<tc>, window_params = [{transform_indices = @transform_0, window_bounds = array<i64: 8, 1024>}, {transform_indices = @transform_1, window_bounds = array<i64: 8, 1024>}, {transform_indices = @transform_2, window_bounds = array<i64: 8, 1024>}]} {
    %c0_i32 = arith.constant 0 : i32
    %0 = arith.cmpi eq, %arg1, %c0_i32 : i32
    %1 = arith.extui %0 : i1 to i32
    %c0_i32_0 = arith.constant 0 : i32
    %2 = arith.cmpi ne, %1, %c0_i32_0 : i32
    scf.if %2 {
      %cst_10 = arith.constant 0.000000e+00 : f32
      %20 = vector.broadcast %cst_10 : f32 to vector<8x1024xf32>
      %c0_11 = arith.constant 0 : index
      %c0_12 = arith.constant 0 : index
      %21 = vector.load %arg4[%c0_11, %c0_12] : memref<8x1024xf32, #tpu.memory_space<vmem>>, vector<8x1024xf32>
      tpu.vector_store %arg4[%c0_11, %c0_12], %20 {strides = array<i32>} : memref<8x1024xf32, #tpu.memory_space<vmem>>, vector<8x1024xf32>,
    } else {
    }
    %c0 = arith.constant 0 : index
    %c0_1 = arith.constant 0 : index
    %3 = vector.load %arg2[%c0, %c0_1] : memref<8x1024xf32, #tpu.memory_space<vmem>>, vector<8x1024xf32>
    %c0_2 = arith.constant 0 : index
    %c0_3 = arith.constant 0 : index
    %4 = vector.load %arg3[%c0_2, %c0_3] : memref<8x1024xf32, #tpu.memory_space<vmem>>, vector<8x1024xf32>
    %cst = arith.constant 0.000000e+00 : f32
    %5 = vector.broadcast %cst : f32 to vector<8x1024xf32>
    %6 = arith.maximumf %3, %5 : vector<8x1024xf32>
    %7 = arith.mulf %3, %4 : vector<8x1024xf32>
    %8 = arith.subf %6, %7 : vector<8x1024xf32>
    %9 = math.absf %3 : vector<8x1024xf32>
    %cst_4 = arith.constant 0.000000e+00 : f32
    %10 = vector.broadcast %cst_4 : f32 to vector<8x1024xf32>
    %11 = arith.subf %10, %9 : vector<8x1024xf32>
    %12 = math.exp %11 : vector<8x1024xf32>
    %13 = math.log1p %12 : vector<8x1024xf32>
    %14 = arith.addf %8, %13 : vector<8x1024xf32>
    %c0_5 = arith.constant 0 : index
    %c0_6 = arith.constant 0 : index
    %15 = vector.load %arg4[%c0_5, %c0_6] : memref<8x1024xf32, #tpu.memory_space<vmem>>, vector<8x1024xf32>
    %16 = vector.shape_cast %14 : vector<8x1024xf32> to vector<1x8x1024xf32>
    %cst_7 = arith.constant dense<0.000000e+00> : vector<8x1024xf32>
    %17 = vector.multi_reduction <add>, %16, %cst_7 [0] : vector<1x8x1024xf32> to vector<8x1024xf32>
    %18 = arith.addf %15, %17 : vector<8x1024xf32>
    %c0_8 = arith.constant 0 : index
    %c0_9 = arith.constant 0 : index
    %19 = vector.load %arg4[%c0_8, %c0_9] : memref<8x1024xf32, #tpu.memory_space<vmem>>, vector<8x1024xf32>
    tpu.vector_store %arg4[%c0_8, %c0_9], %18 {strides = array<i32>} : memref<8x1024xf32, #tpu.memory_space<vmem>>, vector<8x1024xf32>,
    return
  }
  func.func @transform_0(%arg0: i32, %arg1: i32) -> (i32, i32) {
    %c1_i32 = arith.constant 1 : i32
    %0 = arith.muli %arg0, %c1_i32 : i32
    %1 = arith.addi %0, %arg1 : i32
    %c0_i32 = arith.constant 0 : i32
    %c0_i32_0 = arith.constant 0 : i32
    return %1, %c0_i32 : i32, i32
  }
  func.func @transform_1(%arg0: i32, %arg1: i32) -> (i32, i32) {
    %c1_i32 = arith.constant 1 : i32
    %0 = arith.muli %arg0, %c1_i32 : i32
    %1 = arith.addi %0, %arg1 : i32
    %c0_i32 = arith.constant 0 : i32
    %c0_i32_0 = arith.constant 0 : i32
    return %1, %c0_i32 : i32, i32
  }
  func.func @transform_2(%arg0: i32, %arg1: i32) -> (i32, i32) {
    %c0_i32 = arith.constant 0 : i32
    %c0_i32_0 = arith.constant 0 : i32
    return %arg0, %c0_i32 : i32, i32
  }
}

</mosaic_0001>

<llo_original>
// kernel: tpu_custom_call.1
$region0: #{tpu_custom_call.1}
  #allocation0 [shape = 'u32[]', space=smem, size = 0x4, offset = 0x4, fixed_abs, tag = 'smem constant byte address 0x4 - core index']
  #allocation1 [shape = 'u32[72,128]{1,0:T(1,128)}', space=vmem, size = 0x9000, scoped, tag = 'internal scratch']
  %s0 = inlined_call_operand.hbm [shape: f32[16,1024], index: 0, kind: input, shape index: {}]
  %s1 = inlined_call_operand.hbm [shape: f32[16,1024], index: 1, kind: input, shape index: {}]
  %s2 = inlined_call_operand.hbm [shape: f32[16,1024], index: 2, kind: output, shape index: {}]
  %s3 = sld [smem:[#allocation0]]
  $region53: #{tpu_custom_call.1} parent=0
    _
  %s5 = ssub.s32 1, %s3
  %s6 = scalar_select 0, %s5, %s3
  $region1: #{tpu_custom_call.1} parent=0
    #allocation2 [shape = 'u8[65536]{0}', space=vmem, size = 0x10000, scoped, tag = 'input window, operand 0']
    #allocation3 [shape = 's32[2]{0}', space=sflag, size = 0x8, scoped, tag = 'scoped memory for tpu_custom_call.1']
    #allocation4 [shape = 's32[2]{0}', space=sflag, size = 0x8, scoped, tag = 'scoped memory for tpu_custom_call.1']
    #allocation5 [shape = 'u8[65536]{0}', space=vmem, size = 0x10000, scoped, tag = 'input window, operand 1']
    #allocation6 [shape = 's32[2]{0}', space=sflag, size = 0x8, scoped, tag = 'scoped memory for tpu_custom_call.1']
    #allocation7 [shape = 'u8[65536]{0}', space=vmem, size = 0x10000, scoped, tag = 'output window, operand 0']
    %7 = vsyncpa [#allocation3], 0
    %s8 = scalar_lea.sflag [#allocation3], 1
    %9 = vsyncpa %s8, 0
    %10 = vsyncpa [#allocation6], 0
    %s11 = scalar_lea.sflag [#allocation6], 1
    %12 = vsyncpa %s11, 0
    %13 = vsyncpa [#allocation4], 0
    %s14 = scalar_lea.sflag [#allocation4], 1
    %15 = vsyncpa %s14, 0
    loop: start=0, step=1, limit=4
    $region2: #{tpu_custom_call.1} parent=1 // loop_pre_header
      _
    $region3: #{tpu_custom_call.1} parent=1 // loop_header
      %s17 = sphi 0, %s21
      %p18 = scmp.ge.s32.totalorder %s17, 4
      %s24 = sphi 0, %s36
      %s25 = sphi 0, %s32
      %s26 = sphi 0, %s24
      %s27 = sphi 0, %s25
      %s28 = sphi 0, %s26
      %s29 = sphi 0, %s27
      %s41 = sphi 0, %s43
      %s44 = sphi 0, %s41
      %s45 = sphi 0, %s44
      %s61 = sphi 0, %s45
      %s69 = sphi 0, %s71
      %s72 = sphi 0, %s69
      %s73 = sphi 0, %s72
      %s89 = sphi 0, %s73
      %s95 = sphi 0, %s97
      %s98 = sphi 0, %s95
      %s99 = sphi 0, %s98
      %s115 = sphi 0, %s99
    $region4: #{tpu_custom_call.1} parent=1 // loop_header_branch
      %20 = sbr.rel (%p18) target = $region8
    $region5: #{tpu_custom_call.1} parent=1 // loop_body
      %s22 = ssub.s32 %s17, 1
      %s23 = ssub.s32 %s17, 2
      %s30 = sadd.s32 1, %s25
      %p31 = scmp.ge.s32.totalorder %s30, 1
      %s32 = scalar_select %p31, 0, %s30
      %s33 = sadd.s32 1, %s24
      %s34 = scalar_select %p31, %s33, %s24
      %p35 = scmp.ge.s32.totalorder %s34, 2
      %s36 = scalar_select %p35, 0, %s34
      %s37 = sadd.s32 %s24, %s25
      %s38 = sadd.s32 %s36, %s32
      %s39 = ssub.s32 %s37, %s38
      %p40 = scmp.eq.s32.totalorder %s39, 0
      %s42 = sadd.s32 %s41, 1
      %s43 = scalar_select %p40, %s41, %s42
      %p46 = pneg %p40
      %p47 = scmp.eq.s32.totalorder %s17, 1
      %p48 = por %p46, %p47
      %p49 = scmp.ne.s32.totalorder %s41, %s44
      %p50 = scmp.eq.s32.totalorder %s17, 0
      %p51 = por %p49, %p50
      %p52 = scmp.ne.s32.totalorder %s41, %s44
      %p53 = scmp.eq.s32.totalorder %s22, 1
      %p54 = por %p52, %p53
      %p55 = scmp.ne.s32.totalorder %s44, %s45
      %p56 = scmp.eq.s32.totalorder %s22, 0
      %p57 = por %p55, %p56
      %p58 = scmp.ne.s32.totalorder %s44, %s45
      %p59 = scmp.eq.s32.totalorder %s23, 1
      %p60 = por %p58, %p59
      %p62 = scmp.ne.s32.totalorder %s45, %s61
      %p63 = scmp.eq.s32.totalorder %s23, 0
      %p64 = por %p62, %p63
      %s65 = sadd.s32 %s24, %s25
      %s66 = sadd.s32 %s36, %s32
      %s67 = ssub.s32 %s65, %s66
      %p68 = scmp.eq.s32.totalorder %s67, 0
      %s70 = sadd.s32 %s69, 1
      %s71 = scalar_select %p68, %s69, %s70
      %p74 = pneg %p68
      %p75 = scmp.eq.s32.totalorder %s17, 1
      %p76 = por %p74, %p75
      %p77 = scmp.ne.s32.totalorder %s69, %s72
      %p78 = scmp.eq.s32.totalorder %s17, 0
      %p79 = por %p77, %p78
      %p80 = scmp.ne.s32.totalorder %s69, %s72
      %p81 = scmp.eq.s32.totalorder %s22, 1
      %p82 = por %p80, %p81
      %p83 = scmp.ne.s32.totalorder %s72, %s73
      %p84 = scmp.eq.s32.totalorder %s22, 0
      %p85 = por %p83, %p84
      %p86 = scmp.ne.s32.totalorder %s72, %s73
      %p87 = scmp.eq.s32.totalorder %s23, 1
      %p88 = por %p86, %p87
      %p90 = scmp.ne.s32.totalorder %s73, %s89
      %p91 = scmp.eq.s32.totalorder %s23, 0
      %p92 = por %p90, %p91
      %s93 = ssub.s32 %s24, %s36
      %p94 = scmp.eq.s32.totalorder %s93, 0
      %s96 = sadd.s32 %s95, 1
      %s97 = scalar_select %p94, %s95, %s96
      %p100 = pneg %p94
      %p101 = scmp.eq.s32.totalorder %s17, 1
      %p102 = por %p100, %p101
      %p103 = scmp.ne.s32.totalorder %s95, %s98
      %p104 = scmp.eq.s32.totalorder %s17, 0
      %p105 = por %p103, %p104
      %p106 = scmp.ne.s32.totalorder %s95, %s98
      %p107 = scmp.eq.s32.totalorder %s22, 1
      %p108 = por %p106, %p107
      %p109 = scmp.ne.s32.totalorder %s98, %s99
      %p110 = scmp.eq.s32.totalorder %s22, 0
      %p111 = por %p109, %p110
      %p112 = scmp.ne.s32.totalorder %s98, %s99
      %p113 = scmp.eq.s32.totalorder %s23, 1
      %p114 = por %p112, %p113
      %p116 = scmp.ne.s32.totalorder %s99, %s115
      %p117 = scmp.eq.s32.totalorder %s23, 0
      %p118 = por %p116, %p117
      %p119 = scmp.le.s32.totalorder 1, %s17
      %p120 = scmp.lt.s32.totalorder %s17, 3
      %p121 = pnand %p119, %p120
      %p122 = pneg %p121
      // Predicated region
      $region9: #{tpu_custom_call.1} parent=5 // pred_check
        _
      $region10: #{tpu_custom_call.1} parent=5 // pred_check_branch
        %124 = sbr.rel (%p121) target = $region12
      $region11: #{tpu_custom_call.1} parent=5 // pred_region
        %s125 = ssub.s32 %s17, 1
      $region12: #{tpu_custom_call.1} parent=5 // pred_fallthru
        _
      %p126 = scmp.lt.s32.totalorder %s17, 2
      // Predicated region
      $region13: #{tpu_custom_call.1} parent=5 // pred_check
        %p127 = pneg %p126
      $region14: #{tpu_custom_call.1} parent=5 // pred_check_branch
        %129 = sbr.rel (%p127) target = $region16
      $region15: #{tpu_custom_call.1} parent=5 // pred_region
        // Predicated region
        $region17: #{tpu_custom_call.1} parent=15 // pred_check
          %p130 = pneg %p51
        $region18: #{tpu_custom_call.1} parent=15 // pred_check_branch
          %132 = sbr.rel (%p130) target = $region20
        $region19: #{tpu_custom_call.1} parent=15 // pred_region
          %s133 = sand.u32 %s41, 1
          %s134 = scalar_lea.sflag [#allocation3], %s133
          %s135 = sand.u32 %s41, 1
          %s136 = smul.addr %s135, 64
          %s137 = scalar_lea.vmem [#allocation2], %s136
          %s138 = sadd.s32 %s24, %s25
          %140 = vsyncadd %s134, 0
          %s141 = smul.addr %s138, 8
          %s142 = smul.addr %s141, 8
          %s143 = scalar_lea.hbm %s0, %s142
          %s145 = sshll.u32 %s143, 4
          %s146 = int_to_ptr.hbm [resolvable:$true] %s145
          %s147 = sshll.u32 %s137, 4
          %s148 = int_to_ptr.vmem [resolvable:$true] %s147
          %150 = dma.hbm_to_vmem [thread:$0]  %s146, 1024, %s148, %s134
        $region20: #{tpu_custom_call.1} parent=15 // pred_fallthru
          _
        // Predicated region
        $region21: #{tpu_custom_call.1} parent=15 // pred_check
          %p151 = pneg %p79
        $region22: #{tpu_custom_call.1} parent=15 // pred_check_branch
          %153 = sbr.rel (%p151) target = $region24
        $region23: #{tpu_custom_call.1} parent=15 // pred_region
          %s154 = sand.u32 %s69, 1
          %s155 = scalar_lea.sflag [#allocation6], %s154
          %s156 = sand.u32 %s69, 1
          %s157 = smul.addr %s156, 64
          %s158 = scalar_lea.vmem [#allocation5], %s157
          %s159 = sadd.s32 %s24, %s25
          %161 = vsyncadd %s155, 0
          %s162 = smul.addr %s159, 8
          %s163 = smul.addr %s162, 8
          %s164 = scalar_lea.hbm %s1, %s163
          %s166 = sshll.u32 %s164, 4
          %s167 = int_to_ptr.hbm [resolvable:$true] %s166
          %s168 = sshll.u32 %s158, 4
          %s169 = int_to_ptr.vmem [resolvable:$true] %s168
          %171 = dma.hbm_to_vmem [thread:$0]  %s167, 1024, %s169, %s155
        $region24: #{tpu_custom_call.1} parent=15 // pred_fallthru
          _
      $region16: #{tpu_custom_call.1} parent=5 // pred_fallthru
        _
      %p172 = scmp.le.s32.totalorder 1, %s17
      %p173 = scmp.lt.s32.totalorder %s17, 3
      %p174 = pnand %p172, %p173
      %p175 = pneg %p174
      // Predicated region
      $region25: #{tpu_custom_call.1} parent=5 // pred_check
        _
      $region26: #{tpu_custom_call.1} parent=5 // pred_check_branch
        %177 = sbr.rel (%p174) target = $region28
      $region27: #{tpu_custom_call.1} parent=5 // pred_region
        %s178 = ssub.s32 %s17, 1
        %s179 = sand.u32 %s44, 1
        %s180 = scalar_lea.sflag [#allocation3], %s179
        %s181 = sand.u32 %s44, 1
        %s182 = smul.addr %s181, 64
        %s183 = scalar_lea.vmem [#allocation2], %s182
        // Predicated region
        $region29: #{tpu_custom_call.1} parent=27 // pred_check
          %p184 = pneg %p57
        $region30: #{tpu_custom_call.1} parent=27 // pred_check_branch
          %186 = sbr.rel (%p184) target = $region32
        $region31: #{tpu_custom_call.1} parent=27 // pred_region
          %188 = dma.done %s180, 1024
        $region32: #{tpu_custom_call.1} parent=27 // pred_fallthru
          _
        %s189 = sand.u32 %s72, 1
        %s190 = scalar_lea.sflag [#allocation6], %s189
        %s191 = sand.u32 %s72, 1
        %s192 = smul.addr %s191, 64
        %s193 = scalar_lea.vmem [#allocation5], %s192
        // Predicated region
        $region33: #{tpu_custom_call.1} parent=27 // pred_check
          %p194 = pneg %p85
        $region34: #{tpu_custom_call.1} parent=27 // pred_check_branch
          %196 = sbr.rel (%p194) target = $region36
        $region35: #{tpu_custom_call.1} parent=27 // pred_region
          %198 = dma.done %s190, 1024
        $region36: #{tpu_custom_call.1} parent=27 // pred_fallthru
          _
        %s199 = sand.u32 %s44, 1
        %s200 = scalar_lea.sflag [#allocation3], %s199
        %s201 = sand.u32 %s44, 1
        %s202 = smul.addr %s201, 64
        %s203 = scalar_lea.vmem [#allocation2], %s202
        %p204 = pneg %p57
        %p205 = pneg %p54
        %s206 = sand.u32 %s72, 1
        %s207 = scalar_lea.sflag [#allocation6], %s206
        %s208 = sand.u32 %s72, 1
        %s209 = smul.addr %s208, 64
        %s210 = scalar_lea.vmem [#allocation5], %s209
        %p211 = pneg %p85
        %p212 = pneg %p82
        %p213 = pneg %p111
        %p214 = pneg %p108
        %s215 = sand.u32 %s98, 1
        %s216 = scalar_lea.sflag [#allocation4], %s215
        %s217 = sand.u32 %s98, 1
        %s218 = smul.addr %s217, 64
        %s219 = scalar_lea.vmem [#allocation7], %s218
        %s220 = sadd.s32 %s26, %s27
        %s221 = sadd.s32 %s26, %s27
        %p222 = scmp.eq.s32.totalorder %s27, 0
        // Predicated region
        $region37: #{tpu_custom_call.1} parent=27 // pred_check
          %p223 = pneg %p222
        $region38: #{tpu_custom_call.1} parent=27 // pred_check_branch
          %225 = sbr.rel (%p223) target = $region40
        $region39: #{tpu_custom_call.1} parent=27 // pred_region
          %226 = vst [vmem:[%s219] sm:$0xff] 0.0
          %227 = vst [vmem:[%s219 + $0x8] sm:$0xff] 0.0
          %228 = vst [vmem:[%s219 + $0x10] sm:$0xff] 0.0
          %229 = vst [vmem:[%s219 + $0x18] sm:$0xff] 0.0
          %230 = vst [vmem:[%s219 + $0x20] sm:$0xff] 0.0
          %231 = vst [vmem:[%s219 + $0x28] sm:$0xff] 0.0
          %232 = vst [vmem:[%s219 + $0x30] sm:$0xff] 0.0
          %233 = vst [vmem:[%s219 + $0x38] sm:$0xff] 0.0
        $region40: #{tpu_custom_call.1} parent=27 // pred_fallthru
          _
        %v234 = vld [vmem:[%s183] sm:$0xff]
        %v235 = vld [vmem:[%s183 + $0x8] sm:$0xff]
        %v236 = vld [vmem:[%s183 + $0x10] sm:$0xff]
        %v237 = vld [vmem:[%s183 + $0x18] sm:$0xff]
        %v238 = vld [vmem:[%s183 + $0x20] sm:$0xff]
        %v239 = vld [vmem:[%s183 + $0x28] sm:$0xff]
        %v240 = vld [vmem:[%s183 + $0x30] sm:$0xff]
        %v241 = vld [vmem:[%s183 + $0x38] sm:$0xff]
        %v242 = vld [vmem:[%s193] sm:$0xff]
        %v243 = vld [vmem:[%s193 + $0x8] sm:$0xff]
        %v244 = vld [vmem:[%s193 + $0x10] sm:$0xff]
        %v245 = vld [vmem:[%s193 + $0x18] sm:$0xff]
        %v246 = vld [vmem:[%s193 + $0x20] sm:$0xff]
        %v247 = vld [vmem:[%s193 + $0x28] sm:$0xff]
        %v248 = vld [vmem:[%s193 + $0x30] sm:$0xff]
        %v249 = vld [vmem:[%s193 + $0x38] sm:$0xff]
        %v250 = vmax.f32 %v234, 0.0
        %v251 = vmax.f32 %v235, 0.0
        %v252 = vmax.f32 %v236, 0.0
        %v253 = vmax.f32 %v237, 0.0
        %v254 = vmax.f32 %v238, 0.0
        %v255 = vmax.f32 %v239, 0.0
        %v256 = vmax.f32 %v240, 0.0
        %v257 = vmax.f32 %v241, 0.0
        %v258 = vmul.f32 %v234, %v242
        %v259 = vmul.f32 %v235, %v243
        %v260 = vmul.f32 %v236, %v244
        %v261 = vmul.f32 %v237, %v245
        %v262 = vmul.f32 %v238, %v246
        %v263 = vmul.f32 %v239, %v247
        %v264 = vmul.f32 %v240, %v248
        %v265 = vmul.f32 %v241, %v249
        %v266 = vsub.f32 %v250, %v258
        %v267 = vsub.f32 %v251, %v259
        %v268 = vsub.f32 %v252, %v260
        %v269 = vsub.f32 %v253, %v261
        %v270 = vsub.f32 %v254, %v262
        %v271 = vsub.f32 %v255, %v263
        %v272 = vsub.f32 %v256, %v264
        %v273 = vsub.f32 %v257, %v265
        %v274 = vand.u32 2147483647, %v234
        %v275 = vand.u32 2147483647, %v235
        %v276 = vand.u32 2147483647, %v236
        %v277 = vand.u32 2147483647, %v237
        %v278 = vand.u32 2147483647, %v238
        %v279 = vand.u32 2147483647, %v239
        %v280 = vand.u32 2147483647, %v240
        %v281 = vand.u32 2147483647, %v241
        %v282 = vsub.f32 0.0, %v274
        %v283 = vsub.f32 0.0, %v275
        %v284 = vsub.f32 0.0, %v276
        %v285 = vsub.f32 0.0, %v277
        %v286 = vsub.f32 0.0, %v278
        %v287 = vsub.f32 0.0, %v279
        %v288 = vsub.f32 0.0, %v280
        %v289 = vsub.f32 0.0, %v281
        %v290 = vmul.f32 %v282, 1.442695
        %v291 = vpow.pop %v290
        %v292 = vmul.f32 %v283, 1.442695
        %v293 = vpow.pop %v292
        %v294 = vmul.f32 %v284, 1.442695
        %v295 = vpow.pop %v294
        %v296 = vmul.f32 %v285, 1.442695
        %v297 = vpow.pop %v296
        %v298 = vmul.f32 %v286, 1.442695
        %v299 = vpow.pop %v298
        %v300 = vmul.f32 %v287, 1.442695
        %v301 = vpow.pop %v300
        %v302 = vmul.f32 %v288, 1.442695
        %v303 = vpow.pop %v302
        %v304 = vmul.f32 %v289, 1.442695
        %v305 = vpow.pop %v304
        %v306 = vadd.f32 %v291, 1.0
        %v307 = vlog2.pop %v306
        %v308 = vmul.f32 %v307, 0.6931472
        %v309 = vmul.f32 -0.5, %v291
        %v310 = vadd.f32 %v309, 1.0
        %v311 = vmul.f32 %v310, %v291
        %v312 = vand.u32 2147483647, %v291
        %vm313 = vcmp.lt.f32.partialorder %v312, 0.0004427343
        %v314 = vsel %vm313, %v311, %v308
        %v315 = vadd.f32 %v293, 1.0
        %v316 = vlog2.pop %v315
        %v317 = vmul.f32 %v316, 0.6931472
        %v318 = vmul.f32 -0.5, %v293
        %v319 = vadd.f32 %v318, 1.0
        %v320 = vmul.f32 %v319, %v293
        %v321 = vand.u32 2147483647, %v293
        %vm322 = vcmp.lt.f32.partialorder %v321, 0.0004427343
        %v323 = vsel %vm322, %v320, %v317
        %v324 = vadd.f32 %v295, 1.0
        %v325 = vlog2.pop %v324
        %v326 = vmul.f32 %v325, 0.6931472
        %v327 = vmul.f32 -0.5, %v295
        %v328 = vadd.f32 %v327, 1.0
        %v329 = vmul.f32 %v328, %v295
        %v330 = vand.u32 2147483647, %v295
        %vm331 = vcmp.lt.f32.partialorder %v330, 0.0004427343
        %v332 = vsel %vm331, %v329, %v326
        %v333 = vadd.f32 %v297, 1.0
        %v334 = vlog2.pop %v333
        %v335 = vmul.f32 %v334, 0.6931472
        %v336 = vmul.f32 -0.5, %v297
        %v337 = vadd.f32 %v336, 1.0
        %v338 = vmul.f32 %v337, %v297
        %v339 = vand.u32 2147483647, %v297
        %vm340 = vcmp.lt.f32.partialorder %v339, 0.0004427343
        %v341 = vsel %vm340, %v338, %v335
        %v342 = vadd.f32 %v299, 1.0
        %v343 = vlog2.pop %v342
        %v344 = vmul.f32 %v343, 0.6931472
        %v345 = vmul.f32 -0.5, %v299
        %v346 = vadd.f32 %v345, 1.0
        %v347 = vmul.f32 %v346, %v299
        %v348 = vand.u32 2147483647, %v299
        %vm349 = vcmp.lt.f32.partialorder %v348, 0.0004427343
        %v350 = vsel %vm349, %v347, %v344
        %v351 = vadd.f32 %v301, 1.0
        %v352 = vlog2.pop %v351
        %v353 = vmul.f32 %v352, 0.6931472
        %v354 = vmul.f32 -0.5, %v301
        %v355 = vadd.f32 %v354, 1.0
        %v356 = vmul.f32 %v355, %v301
        %v357 = vand.u32 2147483647, %v301
        %vm358 = vcmp.lt.f32.partialorder %v357, 0.0004427343
        %v359 = vsel %vm358, %v356, %v353
        %v360 = vadd.f32 %v303, 1.0
        %v361 = vlog2.pop %v360
        %v362 = vmul.f32 %v361, 0.6931472
        %v363 = vmul.f32 -0.5, %v303
        %v364 = vadd.f32 %v363, 1.0
        %v365 = vmul.f32 %v364, %v303
        %v366 = vand.u32 2147483647, %v303
        %vm367 = vcmp.lt.f32.partialorder %v366, 0.0004427343
        %v368 = vsel %vm367, %v365, %v362
        %v369 = vadd.f32 %v305, 1.0
        %v370 = vlog2.pop %v369
        %v371 = vmul.f32 %v370, 0.6931472
        %v372 = vmul.f32 -0.5, %v305
        %v373 = vadd.f32 %v372, 1.0
        %v374 = vmul.f32 %v373, %v305
        %v375 = vand.u32 2147483647, %v305
        %vm376 = vcmp.lt.f32.partialorder %v375, 0.0004427343
        %v377 = vsel %vm376, %v374, %v371
        %v378 = vadd.f32 %v266, %v314
        %v379 = vadd.f32 %v267, %v323
        %v380 = vadd.f32 %v268, %v332
        %v381 = vadd.f32 %v269, %v341
        %v382 = vadd.f32 %v270, %v350
        %v383 = vadd.f32 %v271, %v359
        %v384 = vadd.f32 %v272, %v368
        %v385 = vadd.f32 %v273, %v377
        %v386 = vld [vmem:[%s219] sm:$0xff]
        %v387 = vld [vmem:[%s219 + $0x8] sm:$0xff]
        %v388 = vld [vmem:[%s219 + $0x10] sm:$0xff]
        %v389 = vld [vmem:[%s219 + $0x18] sm:$0xff]
        %v390 = vld [vmem:[%s219 + $0x20] sm:$0xff]
        %v391 = vld [vmem:[%s219 + $0x28] sm:$0xff]
        %v392 = vld [vmem:[%s219 + $0x30] sm:$0xff]
        %v393 = vld [vmem:[%s219 + $0x38] sm:$0xff]
        %v394 = vadd.f32 %v378, 0.0
        %v395 = vadd.f32 %v379, 0.0
        %v396 = vadd.f32 %v380, 0.0
        %v397 = vadd.f32 %v381, 0.0
        %v398 = vadd.f32 %v382, 0.0
        %v399 = vadd.f32 %v383, 0.0
        %v400 = vadd.f32 %v384, 0.0
        %v401 = vadd.f32 %v385, 0.0
        %v402 = vadd.f32 %v386, %v394
        %v403 = vadd.f32 %v387, %v395
        %v404 = vadd.f32 %v388, %v396
        %v405 = vadd.f32 %v389, %v397
        %v406 = vadd.f32 %v390, %v398
        %v407 = vadd.f32 %v391, %v399
        %v408 = vadd.f32 %v392, %v400
        %v409 = vadd.f32 %v393, %v401
        %410 = vst [vmem:[%s219] sm:$0xff] %v402
        %411 = vst [vmem:[%s219 + $0x8] sm:$0xff] %v403
        %412 = vst [vmem:[%s219 + $0x10] sm:$0xff] %v404
        %413 = vst [vmem:[%s219 + $0x18] sm:$0xff] %v405
        %414 = vst [vmem:[%s219 + $0x20] sm:$0xff] %v406
        %415 = vst [vmem:[%s219 + $0x28] sm:$0xff] %v407
        %416 = vst [vmem:[%s219 + $0x30] sm:$0xff] %v408
        %417 = vst [vmem:[%s219 + $0x38] sm:$0xff] %v409
        %s418 = sand.u32 %s98, 1
        %s419 = scalar_lea.sflag [#allocation4], %s418
        %s420 = sand.u32 %s98, 1
        %s421 = smul.addr %s420, 64
        %s422 = scalar_lea.vmem [#allocation7], %s421
        // Predicated region
        $region41: #{tpu_custom_call.1} parent=27 // pred_check
          %p423 = pneg %p108
        $region42: #{tpu_custom_call.1} parent=27 // pred_check_branch
          %425 = sbr.rel (%p423) target = $region44
        $region43: #{tpu_custom_call.1} parent=27 // pred_region
          %427 = vsyncadd %s419, 0
          %s428 = smul.addr %s26, 8
          %s429 = smul.addr %s428, 8
          %s430 = scalar_lea.hbm %s2, %s429
          %s432 = sshll.u32 %s422, 4
          %s433 = int_to_ptr.vmem [resolvable:$true] %s432
          %s434 = sshll.u32 %s430, 4
          %s435 = int_to_ptr.hbm [resolvable:$true] %s434
          %437 = dma.vmem_to_hbm [thread:$0]  %s433, 1024, %s435, %s419
        $region44: #{tpu_custom_call.1} parent=27 // pred_fallthru
          _
      $region28: #{tpu_custom_call.1} parent=5 // pred_fallthru
        _
      %p438 = scmp.le.s32.totalorder 2, %s17
      // Predicated region
      $region45: #{tpu_custom_call.1} parent=5 // pred_check
        %p439 = pneg %p438
      $region46: #{tpu_custom_call.1} parent=5 // pred_check_branch
        %441 = sbr.rel (%p439) target = $region48
      $region47: #{tpu_custom_call.1} parent=5 // pred_region
        %s442 = ssub.s32 %s17, 2
        // Predicated region
        $region49: #{tpu_custom_call.1} parent=47 // pred_check
          %p443 = pneg %p114
        $region50: #{tpu_custom_call.1} parent=47 // pred_check_branch
          %445 = sbr.rel (%p443) target = $region52
        $region51: #{tpu_custom_call.1} parent=47 // pred_region
          %s446 = sand.u32 %s99, 1
          %s447 = scalar_lea.sflag [#allocation4], %s446
          %s448 = sand.u32 %s99, 1
          %s449 = smul.addr %s448, 64
          %s450 = scalar_lea.vmem [#allocation7], %s449
          %452 = dma.done %s447, 1024
        $region52: #{tpu_custom_call.1} parent=47 // pred_fallthru
          _
      $region48: #{tpu_custom_call.1} parent=5 // pred_fallthru
        _
    $region6: #{tpu_custom_call.1} parent=1 // loop_footer
      %s21 = sadd.s32 1, %s17
    $region7: #{tpu_custom_call.1} parent=1 // loop_footer_branch
      %16 = sbr.rel target = $region3
    $region8: #{tpu_custom_call.1} parent=1 // loop_exit
      _
    %453 = vsyncpa [#allocation3], 1
    %s454 = scalar_lea.sflag [#allocation3], 1
    %455 = vsyncpa %s454, 1
    %456 = vsyncpa [#allocation6], 1
    %s457 = scalar_lea.sflag [#allocation6], 1
    %458 = vsyncpa %s457, 1
    %459 = vsyncpa [#allocation4], 1
    %s460 = scalar_lea.sflag [#allocation4], 1
    %461 = vsyncpa %s460, 1

</llo_original>
